<compile_context>
chip_gen: v5e
topology: v5e:2x2
jax: 0.10.0
libtpu: 0.0.40
codegen_flags: <defaults>
</compile_context>

<pallas_src>
import math

import jax
import jax.numpy as jnp
from jax.experimental import pallas as pl
from jax.experimental.pallas import tpu as pltpu


_N_TAB = 24 + 7 + 32 + 13          # hour | weekday | day | month = 76 table rows


def _round_up(n, m):
    return ((n + m - 1) // m) * m


# ---------------------------------------------------------------------------
# Kernel
# ---------------------------------------------------------------------------
def _data_embedding_kernel(x_ref, mark_ref, w_ref, out_ref):
    # x_ref    : [Bt, L, c_in]     f32
    # mark_ref : [Bt, L, 4]        i32   columns = [month, day, weekday, hour]
    # w_ref    : [K_pad, d_model]  f32   fused tables + conv taps (constant block -> resident)
    # out_ref  : [Bt, L, d_model]
    bt, seq_len, c_in = x_ref.shape
    k_pad, d_model = w_ref.shape
    t_pad = k_pad - 3 * c_in                                    # width of the multi-hot block (>= 76)

    x = x_ref[...]                                              # [Bt, L, c_in]
    # Circular conv taps along the sequence axis: x[(t-1) % L] and x[(t+1) % L].
    x_m1 = jnp.concatenate([x[:, seq_len - 1:, :], x[:, :seq_len - 1, :]], axis=1)
    x_p1 = jnp.concatenate([x[:, 1:, :], x[:, :1, :]], axis=1)

    mark = mark_ref[...]                                        # [Bt, L, 4]
    hour = mark[:, :, 3:4]                                      # -> rows [0, 24)
    wday = mark[:, :, 2:3] + 24                                 # -> rows [24, 31)
    day = mark[:, :, 1:2] + 31                                  # -> rows [31, 63)
    month = mark[:, :, 0:1] + 63                                # -> rows [63, 76)

    iota = jax.lax.broadcasted_iota(jnp.int32, (bt, seq_len, t_pad), 2)
    mh = ((iota == hour) | (iota == wday) | (iota == day)
          | (iota == month)).astype(jnp.float32)                # [Bt, L, t_pad]

    # Wide multi-hot block first (lane 0) so only the tiny x tiles get lane-shifted.
    act = jnp.concatenate([mh, x_m1, x, x_p1], axis=-1)         # [Bt, L, K_pad]
    act = act.reshape(bt * seq_len, k_pad)                      # free relayout when L % 8 == 0

    y = jnp.dot(act, w_ref[...], preferred_element_type=jnp.float32)
    out_ref[...] = y.reshape(bt, seq_len, d_model).astype(out_ref.dtype)


# ---------------------------------------------------------------------------
# Chip-aware block sizing
# ---------------------------------------------------------------------------
def _tpu_budget():
    """Returns (vmem_limit_bytes, working_set_budget_bytes, dual_tensorcore)."""
    vmem_capacity = 64 * 1024 * 1024           # conservative default (v7x per-TC VMEM)
    try:
        info = pltpu.get_tpu_info()
        vmem_capacity = int(getattr(info, "vmem_capacity_bytes", vmem_capacity))
    except Exception:
        pass
    kind = ""
    try:
        kind = jax.devices()[0].device_kind.lower()
    except Exception:
        pass
    # Single-TensorCore chips (v5e / v6e): no point forcing >= 2 grid steps.
    single_tc = ("lite" in kind) or ("v5e" in kind) or ("v6" in kind)

    vmem_limit = min(vmem_capacity * 3 // 4, 96 * 1024 * 1024)   # 96 MiB on 128 MiB chips, 48 MiB on v7x
    vmem_limit = max(vmem_limit, 16 * 1024 * 1024)
    budget = vmem_limit // 2                                     # headroom for pipeline overheads
    return int(vmem_limit), int(budget), (not single_tc)


def _pick_bt(batch, seq_len, c_in, k_pad, d_model, budget_bytes, dual_tc):
    """Largest Bt whose full VMEM working set fits the budget.

    Counts double-buffered x / x_mark / out blocks (last dims pad to 128 lanes in VMEM),
    the resident fused weight (conservatively counted twice) and the in-kernel activation
    temporaries (act + multi-hot).  On dual-TC chips keep >= 2 grid steps when batch >= 2.
    """
    d_lane = _round_up(d_model, 128)
    l_r = _round_up(seq_len, 8)
    per_bt = (2 * l_r * (128 + 128 + d_lane) * 4       # double-buffered x, x_mark, out blocks
              + 2 * l_r * k_pad * 4)                   # act + multi-hot temporaries
    fixed = 2 * k_pad * d_lane * 4                     # fused weight (conservative: 2 buffers)
    bt = max(1, (budget_bytes - fixed) // max(per_bt, 1))
    cap = batch
    if dual_tc and batch >= 2:
        cap = (batch + 1) // 2                         # >= 2 grid steps -> both TCs get work
    return int(max(1, min(bt, cap)))


# ---------------------------------------------------------------------------
# Weight prep (hoisted out of the per-forward hot path -- call once)
# ---------------------------------------------------------------------------
def build_fused_weight(w_conv, hour_tab, wday_tab, day_tab, month_tab):
    """w_conv: [3, c_in, d_model] (kernel_tap, in, out).  Returns [K_pad, d_model]."""
    _, c_in, d_model = w_conv.shape
    k_pad = _round_up(_N_TAB + 3 * c_in, 128)
    t_pad = k_pad - 3 * c_in
    w = jnp.zeros((k_pad, d_model), jnp.float32)
    w = w.at[0:24].set(hour_tab)
    w = w.at[24:31].set(wday_tab)
    w = w.at[31:63].set(day_tab)
    w = w.at[63:76].set(month_tab)
    w = w.at[t_pad + 0 * c_in:t_pad + 1 * c_in].set(w_conv[0])
    w = w.at[t_pad + 1 * c_in:t_pad + 2 * c_in].set(w_conv[1])
    w = w.at[t_pad + 2 * c_in:t_pad + 3 * c_in].set(w_conv[2])
    return w


# ---------------------------------------------------------------------------
# Forward wrapper
# ---------------------------------------------------------------------------
def data_embedding_wo_pos(x, x_mark, w_fused, *, out_dtype=jnp.float32):
    """x: [B, L, c_in] f32, x_mark: [B, L, 4] i32 ([month, day, weekday, hour]) or None,
       w_fused: [K_pad, d_model] from build_fused_weight()."""
    B, L, c_in = x.shape
    k_pad, d_model = w_fused.shape

    if x_mark is None:
        # No temporal embedding: indices that can never match any table row.
        x_mark = jnp.full((B, L, 4), -10000, jnp.int32)
    x_mark = x_mark.astype(jnp.int32)

    vmem_limit, budget, dual_tc = _tpu_budget()
    bt = _pick_bt(B, L, c_in, k_pad, d_model, budget, dual_tc)

    out = pl.pallas_call(
        _data_embedding_kernel,
        out_shape=jax.ShapeDtypeStruct((B, L, d_model), out_dtype),
        grid=(pl.cdiv(B, bt),),
        in_specs=[
            pl.BlockSpec((bt, L, c_in), lambda i: (i, 0, 0)),
            pl.BlockSpec((bt, L, 4), lambda i: (i, 0, 0)),
            pl.BlockSpec((k_pad, d_model), lambda i: (0, 0)),   # constant block -> stays resident
        ],
        out_specs=pl.BlockSpec((bt, L, d_model), lambda i: (i, 0, 0)),
        compiler_params=pltpu.CompilerParams(
            dimension_semantics=("parallel",),
            vmem_limit_bytes=vmem_limit),
    )(x, x_mark, w_fused)
    return out


# ---------------------------------------------------------------------------
# Reference / test harness
# ---------------------------------------------------------------------------
def fixed_embedding_table(c_in, d_model):
    position = jnp.arange(c_in, dtype=jnp.float32)[:, None]
    div_term = jnp.exp(jnp.arange(0, d_model, 2, dtype=jnp.float32)
                       * (-(math.log(10000.0) / d_model)))
    w = jnp.zeros((c_in, d_model), dtype=jnp.float32)
    w = w.at[:, 0::2].set(jnp.sin(position * div_term))
    w = w.at[:, 1::2].set(jnp.cos(position * div_term))
    return w


def reference_forward(x, x_mark, w_conv, hour_tab, wday_tab, day_tab, month_tab):
    hp = jax.lax.Precision.HIGHEST
    xm1 = jnp.roll(x, 1, axis=1)
    xp1 = jnp.roll(x, -1, axis=1)
    y = (jnp.einsum("blc,cd->bld", xm1, w_conv[0], precision=hp)
         + jnp.einsum("blc,cd->bld", x, w_conv[1], precision=hp)
         + jnp.einsum("blc,cd->bld", xp1, w_conv[2], precision=hp))
    temporal = (hour_tab[x_mark[:, :, 3]] + wday_tab[x_mark[:, :, 2]]
                + day_tab[x_mark[:, :, 1]] + month_tab[x_mark[:, :, 0]])
    return y + temporal


if __name__ == "__main__":
    B, L, c_in, d_model = 2, 8, 4, 32

    key = jax.random.PRNGKey(0)
    kx, kmark, kw = jax.random.split(key, 3)

    x = jax.random.normal(kx, (B, L, c_in), dtype=jnp.float32)

    km, kd, kwd, kh = jax.random.split(kmark, 4)
    month = jax.random.randint(km, (B, L, 1), 0, 13, dtype=jnp.int32)
    day = jax.random.randint(kd, (B, L, 1), 0, 32, dtype=jnp.int32)
    wday = jax.random.randint(kwd, (B, L, 1), 0, 7, dtype=jnp.int32)
    hour = jax.random.randint(kh, (B, L, 1), 0, 24, dtype=jnp.int32)
    x_mark = jnp.concatenate([month, day, wday, hour], axis=-1)

    # Conv1d weight [d_model, c_in, 3], kaiming_normal_(fan_in, leaky_relu) ->
    # stored here directly as [3, c_in, d_model] (kernel_tap, in, out).
    fan_in = c_in * 3
    gain = math.sqrt(2.0 / (1.0 + 0.01 ** 2))
    std = gain / math.sqrt(fan_in)
    w_conv = jax.random.normal(kw, (3, c_in, d_model), dtype=jnp.float32) * std

    hour_tab = fixed_embedding_table(24, d_model)
    wday_tab = fixed_embedding_table(7, d_model)
    day_tab = fixed_embedding_table(32, d_model)
    month_tab = fixed_embedding_table(13, d_model)

    # Weight prep hoisted out of the forward hot path (done once).
    w_fused = build_fused_weight(w_conv, hour_tab, wday_tab, day_tab, month_tab)
    w_fused = jax.block_until_ready(w_fused)

    out = data_embedding_wo_pos(x, x_mark, w_fused)
    out = jax.block_until_ready(out)

    ref = reference_forward(x, x_mark, w_conv, hour_tab, wday_tab, day_tab, month_tab)
    assert out.shape == (B, L, d_model)
    assert jnp.allclose(out, ref, atol=1e-4, rtol=1e-4), "mismatch vs reference"

    print("KERNEL_OK")
</pallas_src>

<mosaic_0001>
module attributes {stable_mosaic.version = 11 : i64} {
  func.func @_data_embedding_kernel(%arg0: i32, %arg1: memref<1x8x4xf32, #tpu.memory_space<vmem>>, %arg2: memref<1x8x4xi32, #tpu.memory_space<vmem>>, %arg3: memref<128x32xf32, #tpu.memory_space<vmem>>, %arg4: memref<1x8x32xf32, #tpu.memory_space<vmem>>) attributes {dimension_semantics = [#tpu.dimension_semantics<parallel>], iteration_bounds = array<i64: 2>, scalar_prefetch = 0 : i64, scratch_operands = 0 : i64, tpu.core_type = #tpu.core_type<tc>, window_params = [{transform_indices = @transform_0, window_bounds = array<i64: 1, 8, 4>}, {transform_indices = @transform_1, window_bounds = array<i64: 1, 8, 4>}, {pipeline_mode = #tpu.pipeline_mode<synchronous>, transform_indices = @transform_2, window_bounds = array<i64: 128, 32>}, {transform_indices = @transform_3, window_bounds = array<i64: 1, 8, 32>}]} {
    %c0 = arith.constant 0 : index
    %c0_0 = arith.constant 0 : index
    %c0_1 = arith.constant 0 : index
    %0 = vector.load %arg1[%c0, %c0_0, %c0_1] : memref<1x8x4xf32, #tpu.memory_space<vmem>>, vector<1x8x4xf32>
    %1 = vector.extract_strided_slice %0 {offsets = [0, 7, 0], sizes = [1, 1, 4], strides = [1, 1, 1]} : vector<1x8x4xf32> to vector<1x1x4xf32>
    %2 = vector.extract_strided_slice %0 {offsets = [0, 0, 0], sizes = [1, 7, 4], strides = [1, 1, 1]} : vector<1x8x4xf32> to vector<1x7x4xf32>
    %3 = tpu.concatenate %1, %2 in 1 : vector<1x1x4xf32>, vector<1x7x4xf32> -> vector<1x8x4xf32>
    %4 = vector.extract_strided_slice %0 {offsets = [0, 1, 0], sizes = [1, 7, 4], strides = [1, 1, 1]} : vector<1x8x4xf32> to vector<1x7x4xf32>
    %5 = vector.extract_strided_slice %0 {offsets = [0, 0, 0], sizes = [1, 1, 4], strides = [1, 1, 1]} : vector<1x8x4xf32> to vector<1x1x4xf32>
    %6 = tpu.concatenate %4, %5 in 1 : vector<1x7x4xf32>, vector<1x1x4xf32> -> vector<1x8x4xf32>
    %c0_2 = arith.constant 0 : index
    %c0_3 = arith.constant 0 : index
    %c0_4 = arith.constant 0 : index
    %7 = vector.load %arg2[%c0_2, %c0_3, %c0_4] : memref<1x8x4xi32, #tpu.memory_space<vmem>>, vector<1x8x4xi32>
    %8 = vector.extract_strided_slice %7 {offsets = [0, 0, 3], sizes = [1, 8, 1], strides = [1, 1, 1]} : vector<1x8x4xi32> to vector<1x8x1xi32>
    %9 = vector.extract_strided_slice %7 {offsets = [0, 0, 2], sizes = [1, 8, 1], strides = [1, 1, 1]} : vector<1x8x4xi32> to vector<1x8x1xi32>
    %c24_i32 = arith.constant 24 : i32
    %10 = vector.broadcast %c24_i32 : i32 to vector<1x8x1xi32>
    %11 = arith.addi %9, %10 : vector<1x8x1xi32>
    %12 = vector.extract_strided_slice %7 {offsets = [0, 0, 1], sizes = [1, 8, 1], strides = [1, 1, 1]} : vector<1x8x4xi32> to vector<1x8x1xi32>
    %c31_i32 = arith.constant 31 : i32
    %13 = vector.broadcast %c31_i32 : i32 to vector<1x8x1xi32>
    %14 = arith.addi %12, %13 : vector<1x8x1xi32>
    %15 = vector.extract_strided_slice %7 {offsets = [0, 0, 0], sizes = [1, 8, 1], strides = [1, 1, 1]} : vector<1x8x4xi32> to vector<1x8x1xi32>
    %c63_i32 = arith.constant 63 : i32
    %16 = vector.broadcast %c63_i32 : i32 to vector<1x8x1xi32>
    %17 = arith.addi %15, %16 : vector<1x8x1xi32>
    %18 = tpu.iota {dimensions = array<i32: 2>} : vector<1x8x116xi32>
    %19 = vector.broadcast %8 : vector<1x8x1xi32> to vector<1x8x116xi32>
    %20 = arith.cmpi eq, %18, %19 : vector<1x8x116xi32>
    %21 = vector.broadcast %11 : vector<1x8x1xi32> to vector<1x8x116xi32>
    %22 = arith.cmpi eq, %18, %21 : vector<1x8x116xi32>
    %23 = arith.ori %20, %22 : vector<1x8x116xi1>
    %24 = vector.broadcast %14 : vector<1x8x1xi32> to vector<1x8x116xi32>
    %25 = arith.cmpi eq, %18, %24 : vector<1x8x116xi32>
    %26 = arith.ori %23, %25 : vector<1x8x116xi1>
    %27 = vector.broadcast %17 : vector<1x8x1xi32> to vector<1x8x116xi32>
    %28 = arith.cmpi eq, %18, %27 : vector<1x8x116xi32>
    %29 = arith.ori %26, %28 : vector<1x8x116xi1>
    %30 = arith.extui %29 : vector<1x8x116xi1> to vector<1x8x116xi32>
    %31 = arith.sitofp %30 : vector<1x8x116xi32> to vector<1x8x116xf32>
    %32 = tpu.concatenate %31, %3, %0, %6 in 2 : vector<1x8x116xf32>, vector<1x8x4xf32>, vector<1x8x4xf32>, vector<1x8x4xf32> -> vector<1x8x128xf32>
    %33 = vector.shape_cast %32 : vector<1x8x128xf32> to vector<8x128xf32>
    %c0_5 = arith.constant 0 : index
    %c0_6 = arith.constant 0 : index
    %34 = vector.load %arg3[%c0_5, %c0_6] : memref<128x32xf32, #tpu.memory_space<vmem>>, vector<128x32xf32>
    %cst = arith.constant dense<0.000000e+00> : vector<8x32xf32>
    %35 = tpu.matmul %33, %34, %cst {dimension_numbers = #tpu.dot_dimension_numbers<[1], [0], [0], [1], [0, 0, 1, 1], [], []>} : vector<8x128xf32>, vector<128x32xf32>, vector<8x32xf32> -> vector<8x32xf32>
    %36 = vector.shape_cast %35 : vector<8x32xf32> to vector<1x8x32xf32>
    %c0_7 = arith.constant 0 : index
    %c0_8 = arith.constant 0 : index
    %c0_9 = arith.constant 0 : index
    %37 = vector.load %arg4[%c0_7, %c0_8, %c0_9] : memref<1x8x32xf32, #tpu.memory_space<vmem>>, vector<1x8x32xf32>
    tpu.vector_store %arg4[%c0_7, %c0_8, %c0_9], %36 {strides = array<i32>} : memref<1x8x32xf32, #tpu.memory_space<vmem>>, vector<1x8x32xf32>,
    return
  }
  func.func @transform_0(%arg0: i32) -> (i32, i32, i32) {
    %c0_i32 = arith.constant 0 : i32
    %c0_i32_0 = arith.constant 0 : i32
    %c0_i32_1 = arith.constant 0 : i32
    return %arg0, %c0_i32, %c0_i32_0 : i32, i32, i32
  }
  func.func @transform_1(%arg0: i32) -> (i32, i32, i32) {
    %c0_i32 = arith.constant 0 : i32
    %c0_i32_0 = arith.constant 0 : i32
    %c0_i32_1 = arith.constant 0 : i32
    return %arg0, %c0_i32, %c0_i32_0 : i32, i32, i32
  }
  func.func @transform_2(%arg0: i32) -> (i32, i32) {
    %c0_i32 = arith.constant 0 : i32
    %c0_i32_0 = arith.constant 0 : i32
    %c0_i32_1 = arith.constant 0 : i32
    return %c0_i32, %c0_i32_0 : i32, i32
  }
  func.func @transform_3(%arg0: i32) -> (i32, i32, i32) {
    %c0_i32 = arith.constant 0 : i32
    %c0_i32_0 = arith.constant 0 : i32
    %c0_i32_1 = arith.constant 0 : i32
    return %arg0, %c0_i32, %c0_i32_0 : i32, i32, i32
  }
}

</mosaic_0001>

<llo_original>
// kernel: tpu_custom_call.1
$region0: #{tpu_custom_call.1}
  #allocation0 [shape = 'u32[]', space=smem, size = 0x4, offset = 0x4, fixed_abs, tag = 'smem constant byte address 0x4 - core index']
  #allocation1 [shape = 'u32[72,128]{1,0:T(1,128)}', space=vmem, size = 0x9000, scoped, tag = 'internal scratch']
  %s0 = inlined_call_operand.vmem [shape: f32[2,8,4], index: 0, kind: input, shape index: {}]
  %s1 = inlined_call_operand.vmem [shape: s32[2,8,4], index: 1, kind: input, shape index: {}]
  %s2 = inlined_call_operand.vmem [shape: f32[128,32], index: 2, kind: input, shape index: {}]
  %s3 = inlined_call_operand.hbm [shape: f32[2,8,32], index: 3, kind: output, shape index: {}]
  %s4 = sld [smem:[#allocation0]]
  $region45: #{tpu_custom_call.1} parent=0
    _
  %s6 = ssub.s32 1, %s4
  %s7 = scalar_select 0, %s6, %s4
  $region1: #{tpu_custom_call.1} parent=0
    #allocation2 [shape = 'u8[8192]{0}', space=vmem, size = 0x2000, scoped, tag = 'output window, operand 0']
    #allocation3 [shape = 's32[2]{0}', space=sflag, size = 0x8, scoped, tag = 'scoped memory for tpu_custom_call.1']
    %8 = vsyncpa [#allocation3], 0
    %s9 = scalar_lea.sflag [#allocation3], 1
    %10 = vsyncpa %s9, 0
    loop: start=0, step=1, limit=4
    $region2: #{tpu_custom_call.1} parent=1 // loop_pre_header
      _
    $region3: #{tpu_custom_call.1} parent=1 // loop_header
      %s12 = sphi 0, %s16
      %p13 = scmp.ge.s32.totalorder %s12, 4
      %s22 = sphi 0, %s24
      %s25 = sphi 0, %s22
      %s26 = sphi 0, %s25
      %s42 = sphi 0, %s26
      %s48 = sphi 0, %s50
      %s51 = sphi 0, %s48
      %s52 = sphi 0, %s51
      %s68 = sphi 0, %s52
      %s72 = sphi 0, %s72
      %s74 = sphi 0, %s72
      %s75 = sphi 0, %s74
      %s89 = sphi 0, %s75
      %s95 = sphi 0, %s97
      %s98 = sphi 0, %s95
      %s99 = sphi 0, %s98
      %s115 = sphi 0, %s99
    $region4: #{tpu_custom_call.1} parent=1 // loop_header_branch
      %15 = sbr.rel (%p13) target = $region8
    $region5: #{tpu_custom_call.1} parent=1 // loop_body
      %s17 = ssub.s32 %s12, 1
      %s18 = ssub.s32 %s12, 2
      %s19 = sadd.s32 %s12, 1
      %s20 = ssub.s32 %s12, %s19
      %p21 = scmp.eq.s32.totalorder %s20, 0
      %s23 = sadd.s32 %s22, 1
      %s24 = scalar_select %p21, %s22, %s23
      %p27 = pneg %p21
      %p28 = scmp.eq.s32.totalorder %s12, 1
      %p29 = por %p27, %p28
      %p30 = scmp.ne.s32.totalorder %s22, %s25
      %p31 = scmp.eq.s32.totalorder %s12, 0
      %p32 = por %p30, %p31
      %p33 = scmp.ne.s32.totalorder %s22, %s25
      %p34 = scmp.eq.s32.totalorder %s17, 1
      %p35 = por %p33, %p34
      %p36 = scmp.ne.s32.totalorder %s25, %s26
      %p37 = scmp.eq.s32.totalorder %s17, 0
      %p38 = por %p36, %p37
      %p39 = scmp.ne.s32.totalorder %s25, %s26
      %p40 = scmp.eq.s32.totalorder %s18, 1
      %p41 = por %p39, %p40
      %p43 = scmp.ne.s32.totalorder %s26, %s42
      %p44 = scmp.eq.s32.totalorder %s18, 0
      %p45 = por %p43, %p44
      %s46 = ssub.s32 %s12, %s19
      %p47 = scmp.eq.s32.totalorder %s46, 0
      %s49 = sadd.s32 %s48, 1
      %s50 = scalar_select %p47, %s48, %s49
      %p53 = pneg %p47
      %p54 = scmp.eq.s32.totalorder %s12, 1
      %p55 = por %p53, %p54
      %p56 = scmp.ne.s32.totalorder %s48, %s51
      %p57 = scmp.eq.s32.totalorder %s12, 0
      %p58 = por %p56, %p57
      %p59 = scmp.ne.s32.totalorder %s48, %s51
      %p60 = scmp.eq.s32.totalorder %s17, 1
      %p61 = por %p59, %p60
      %p62 = scmp.ne.s32.totalorder %s51, %s52
      %p63 = scmp.eq.s32.totalorder %s17, 0
      %p64 = por %p62, %p63
      %p65 = scmp.ne.s32.totalorder %s51, %s52
      %p66 = scmp.eq.s32.totalorder %s18, 1
      %p67 = por %p65, %p66
      %p69 = scmp.ne.s32.totalorder %s52, %s68
      %p70 = scmp.eq.s32.totalorder %s18, 0
      %p71 = por %p69, %p70
      %s73 = sadd.s32 %s72, 1
      %p76 = scmp.eq.s32.totalorder %s12, 1
      %p77 = scmp.ne.s32.totalorder %s72, %s74
      %p78 = scmp.eq.s32.totalorder %s12, 0
      %p79 = por %p77, %p78
      %p80 = scmp.ne.s32.totalorder %s72, %s74
      %p81 = scmp.eq.s32.totalorder %s17, 1
      %p82 = por %p80, %p81
      %p83 = scmp.ne.s32.totalorder %s74, %s75
      %p84 = scmp.eq.s32.totalorder %s17, 0
      %p85 = por %p83, %p84
      %p86 = scmp.ne.s32.totalorder %s74, %s75
      %p87 = scmp.eq.s32.totalorder %s18, 1
      %p88 = por %p86, %p87
      %p90 = scmp.ne.s32.totalorder %s75, %s89
      %p91 = scmp.eq.s32.totalorder %s18, 0
      %p92 = por %p90, %p91
      %s93 = ssub.s32 %s12, %s19
      %p94 = scmp.eq.s32.totalorder %s93, 0
      %s96 = sadd.s32 %s95, 1
      %s97 = scalar_select %p94, %s95, %s96
      %p100 = pneg %p94
      %p101 = scmp.eq.s32.totalorder %s12, 1
      %p102 = por %p100, %p101
      %p103 = scmp.ne.s32.totalorder %s95, %s98
      %p104 = scmp.eq.s32.totalorder %s12, 0
      %p105 = por %p103, %p104
      %p106 = scmp.ne.s32.totalorder %s95, %s98
      %p107 = scmp.eq.s32.totalorder %s17, 1
      %p108 = por %p106, %p107
      %p109 = scmp.ne.s32.totalorder %s98, %s99
      %p110 = scmp.eq.s32.totalorder %s17, 0
      %p111 = por %p109, %p110
      %p112 = scmp.ne.s32.totalorder %s98, %s99
      %p113 = scmp.eq.s32.totalorder %s18, 1
      %p114 = por %p112, %p113
      %p116 = scmp.ne.s32.totalorder %s99, %s115
      %p117 = scmp.eq.s32.totalorder %s18, 0
      %p118 = por %p116, %p117
      %p119 = scmp.le.s32.totalorder 1, %s12
      %p120 = scmp.lt.s32.totalorder %s12, 3
      %p121 = pnand %p119, %p120
      %p122 = pneg %p121
      // Predicated region
      $region9: #{tpu_custom_call.1} parent=5 // pred_check
        _
      $region10: #{tpu_custom_call.1} parent=5 // pred_check_branch
        %124 = sbr.rel (%p121) target = $region12
      $region11: #{tpu_custom_call.1} parent=5 // pred_region
        %s125 = ssub.s32 %s12, 1
        // Predicated region
        $region13: #{tpu_custom_call.1} parent=11 // pred_check
          %p126 = pneg %p85
        $region14: #{tpu_custom_call.1} parent=11 // pred_check_branch
          %128 = sbr.rel (%p126) target = $region16
        $region15: #{tpu_custom_call.1} parent=11 // pred_region
          _
        $region16: #{tpu_custom_call.1} parent=11 // pred_fallthru
          _
      $region12: #{tpu_custom_call.1} parent=5 // pred_fallthru
        _
      %p129 = scmp.lt.s32.totalorder %s12, 2
      // Predicated region
      $region17: #{tpu_custom_call.1} parent=5 // pred_check
        %p130 = pneg %p129
      $region18: #{tpu_custom_call.1} parent=5 // pred_check_branch
        %132 = sbr.rel (%p130) target = $region20
      $region19: #{tpu_custom_call.1} parent=5 // pred_region
        // Predicated region
        $region21: #{tpu_custom_call.1} parent=19 // pred_check
          %p133 = pneg %p32
        $region22: #{tpu_custom_call.1} parent=19 // pred_check_branch
          %135 = sbr.rel (%p133) target = $region24
        $region23: #{tpu_custom_call.1} parent=19 // pred_region
          %p136 = scmp.lt.s32.totalorder %s12, 1
          %s137 = scalar_select %p136, %s12, 1
          %s138 = smul.addr %s137, 8
          %s139 = scalar_lea.vmem %s0, %s138
        $region24: #{tpu_custom_call.1} parent=19 // pred_fallthru
          _
        // Predicated region
        $region25: #{tpu_custom_call.1} parent=19 // pred_check
          %p140 = pneg %p58
        $region26: #{tpu_custom_call.1} parent=19 // pred_check_branch
          %142 = sbr.rel (%p140) target = $region28
        $region27: #{tpu_custom_call.1} parent=19 // pred_region
          %p143 = scmp.lt.s32.totalorder %s12, 1
          %s144 = scalar_select %p143, %s12, 1
          %s145 = smul.addr %s144, 8
          %s146 = scalar_lea.vmem %s1, %s145
        $region28: #{tpu_custom_call.1} parent=19 // pred_fallthru
          _
      $region20: #{tpu_custom_call.1} parent=5 // pred_fallthru
        _
      %p147 = scmp.le.s32.totalorder 1, %s12
      %p148 = scmp.lt.s32.totalorder %s12, 3
      %p149 = pnand %p147, %p148
      %p150 = pneg %p149
      // Predicated region
      $region29: #{tpu_custom_call.1} parent=5 // pred_check
        _
      $region30: #{tpu_custom_call.1} parent=5 // pred_check_branch
        %152 = sbr.rel (%p149) target = $region32
      $region31: #{tpu_custom_call.1} parent=5 // pred_region
        %s153 = ssub.s32 %s12, 1
        %p154 = scmp.lt.s32.totalorder %s17, 1
        %s155 = scalar_select %p154, %s17, 1
        %s156 = smul.addr %s155, 8
        %s157 = scalar_lea.vmem %s0, %s156
        %p158 = pneg %p38
        %p159 = pneg %p35
        %p160 = scmp.lt.s32.totalorder %s17, 1
        %s161 = scalar_select %p160, %s17, 1
        %s162 = smul.addr %s161, 8
        %s163 = scalar_lea.vmem %s1, %s162
        %p164 = pneg %p64
        %p165 = pneg %p61
        %p166 = pneg %p85
        %p167 = pneg %p82
        %p168 = pneg %p111
        %p169 = pneg %p108
        %s170 = sand.u32 %s98, 1
        %s171 = scalar_lea.sflag [#allocation3], %s170
        %s172 = sand.u32 %s98, 1
        %s173 = smul.addr %s172, 8
        %s174 = scalar_lea.vmem [#allocation2], %s173
        %p175 = scmp.lt.s32.totalorder %s17, 1
        %s176 = scalar_select %p175, %s17, 1
        %s177 = smul.addr %s176, 8
        %s178 = scalar_lea.vmem %s0, %s177
        %p179 = scmp.lt.s32.totalorder %s17, 1
        %s180 = scalar_select %p179, %s17, 1
        %s181 = smul.addr %s180, 8
        %s182 = scalar_lea.vmem %s1, %s181
        %v183 = vld [vmem:[%s178] sm:$0xff]
        %v185 = vrot.slane %v183, 7
        %vm187 = vcmask 1040384
        %v188 = vsel %vm187, %v185, %v185
        %v189 = vrot.slane %v183, 1
        %vm191 = vcmask 1046528
        %v192 = vsel %vm191, %v189, %v189
        %v193 = vld [vmem:[%s182] sm:$0xff]
        %v194 = vadd.s32 %v193, 24
        %v195 = vadd.s32 %v193, 31
        %v196 = vadd.s32 %v193, 63
        %v197 = vlaneseq
        %v198 = vand.u32 %v197, 127
        %199 = vset.pattern.permute.xlu0 3
        %200 = vperm.xlu0 %199, %v193
        %v201 = vpop.permute.xlu0 %200
        %vm202 = vcmp.eq.s32.totalorder %v198, %v201
        %203 = vset.pattern.permute.xlu0 2
        %204 = vperm.xlu0 %203, %v194
        %v205 = vpop.permute.xlu0 %204
        %vm206 = vcmp.eq.s32.totalorder %v198, %v205
        %vm207 = vmor %vm202, %vm206
        %208 = vset.pattern.permute.xlu0 1
        %209 = vperm.xlu0 %208, %v195
        %v210 = vpop.permute.xlu0 %209
        %vm211 = vcmp.eq.s32.totalorder %v198, %v210
        %vm212 = vmor %vm207, %vm211
        %213 = vset.pattern.permute.xlu0 0
        %214 = vperm.xlu0 %213, %v196
        %v215 = vpop.permute.xlu0 %214
        %vm216 = vcmp.eq.s32.totalorder %v198, %v215
        %vm217 = vmor %vm212, %vm216
        %v218 = vsel %vm217, 1, 0
        %v219 = vcvt.s32.f32 %v218
        %221 = vrot.lane.b32.xlu0 %v188, 116
        %v222 = vpop.permute.xlu0 %221
        %224 = vrot.lane.b32.xlu0 %v183, 120
        %v225 = vpop.permute.xlu0 %224
        %228 = vrot.lane.b32.xlu0 %v192, 124
        %v229 = vpop.permute.xlu0 %228
        %vm231 = vcmask 949248
        %v232 = vsel %vm231, %v219, %v222
        %vm233 = vcmask 982016
        %v234 = vsel %vm233, %v232, %v225
        %vm235 = vcmask 1014784
        %v236 = vsel %vm235, %v234, %v229
        %v237 = vld [vmem:[%s2] sm:$0xff]
        %v238 = vld [vmem:[%s2 + $0x8] sm:$0xff]
        %v239 = vld [vmem:[%s2 + $0x10] sm:$0xff]
        %v240 = vld [vmem:[%s2 + $0x18] sm:$0xff]
        %v241 = vld [vmem:[%s2 + $0x20] sm:$0xff]
        %v242 = vld [vmem:[%s2 + $0x28] sm:$0xff]
        %v243 = vld [vmem:[%s2 + $0x30] sm:$0xff]
        %v244 = vld [vmem:[%s2 + $0x38] sm:$0xff]
        %v245 = vld [vmem:[%s2 + $0x40] sm:$0xff]
        %v246 = vld [vmem:[%s2 + $0x48] sm:$0xff]
        %v247 = vld [vmem:[%s2 + $0x50] sm:$0xff]
        %v248 = vld [vmem:[%s2 + $0x58] sm:$0xff]
        %v249 = vld [vmem:[%s2 + $0x60] sm:$0xff]
        %v250 = vld [vmem:[%s2 + $0x68] sm:$0xff]
        %v251 = vld [vmem:[%s2 + $0x70] sm:$0xff]
        %v252 = vld [vmem:[%s2 + $0x78] sm:$0xff]
        %253 = vmatpush.msra.mxu0 %v252
        %254 = vmatpush.msra.mxu0 %v251
        %255 = vmatpush.msra.mxu0 %v250
        %256 = vmatpush.msra.mxu0 %v249
        %257 = vmatpush.msra.mxu0 %v248
        %258 = vmatpush.msra.mxu0 %v247
        %259 = vmatpush.msra.mxu0 %v246
        %260 = vmatpush.msra.mxu0 %v245
        %261 = vmatpush.msra.mxu0 %v244
        %262 = vmatpush.msra.mxu0 %v243
        %263 = vmatpush.msra.mxu0 %v242
        %264 = vmatpush.msra.mxu0 %v241
        %265 = vmatpush.msra.mxu0 %v240
        %266 = vmatpush.msra.mxu0 %v239
        %267 = vmatpush.msra.mxu0 %v238
        %268 = vmatpush.msra.mxu0 %v237
        %269 = vmatmul.f32.gmra.mxu0 %v236
        %v270 = vpop.f32.mrf.mxu0
        %v271 = vadd.f32 0.0, %v270
        %272 = vdwg.mxu0
        %vm273 = vcmask 261120
        %274 = vst.msk [vmem:[%s174] sm:$0xff] %vm273, %v271
        %s275 = sand.u32 %s98, 1
        %s276 = scalar_lea.sflag [#allocation3], %s275
        %s277 = sand.u32 %s98, 1
        %s278 = smul.addr %s277, 8
        %s279 = scalar_lea.vmem [#allocation2], %s278
        // Predicated region
        $region33: #{tpu_custom_call.1} parent=31 // pred_check
          %p280 = pneg %p108
        $region34: #{tpu_custom_call.1} parent=31 // pred_check_branch
          %282 = sbr.rel (%p280) target = $region36
        $region35: #{tpu_custom_call.1} parent=31 // pred_region
          %284 = vsyncadd %s276, 0
          %s285 = smul.addr %s17, 8
          %s286 = scalar_lea.hbm %s3, %s285
          %s288 = sshll.u32 %s279, 4
          %s289 = int_to_ptr.vmem [resolvable:$true] %s288
          %s290 = sshll.u32 %s286, 4
          %s291 = int_to_ptr.hbm [resolvable:$true] %s290
          %293 = dma.vmem_to_hbm [thread:$0]  %s289, 128, %s291, %s276
        $region36: #{tpu_custom_call.1} parent=31 // pred_fallthru
          _
      $region32: #{tpu_custom_call.1} parent=5 // pred_fallthru
        _
      %p294 = scmp.le.s32.totalorder 2, %s12
      // Predicated region
      $region37: #{tpu_custom_call.1} parent=5 // pred_check
        %p295 = pneg %p294
      $region38: #{tpu_custom_call.1} parent=5 // pred_check_branch
        %297 = sbr.rel (%p295) target = $region40
      $region39: #{tpu_custom_call.1} parent=5 // pred_region
        %s298 = ssub.s32 %s12, 2
        // Predicated region
        $region41: #{tpu_custom_call.1} parent=39 // pred_check
          %p299 = pneg %p114
        $region42: #{tpu_custom_call.1} parent=39 // pred_check_branch
          %301 = sbr.rel (%p299) target = $region44
        $region43: #{tpu_custom_call.1} parent=39 // pred_region
          %s302 = sand.u32 %s99, 1
          %s303 = scalar_lea.sflag [#allocation3], %s302
          %s304 = sand.u32 %s99, 1
          %s305 = smul.addr %s304, 8
          %s306 = scalar_lea.vmem [#allocation2], %s305
          %308 = dma.done %s303, 128
        $region44: #{tpu_custom_call.1} parent=39 // pred_fallthru
          _
      $region40: #{tpu_custom_call.1} parent=5 // pred_fallthru
        _
    $region6: #{tpu_custom_call.1} parent=1 // loop_footer
      %s16 = sadd.s32 1, %s12
    $region7: #{tpu_custom_call.1} parent=1 // loop_footer_branch
      %11 = sbr.rel target = $region3
    $region8: #{tpu_custom_call.1} parent=1 // loop_exit
      _
    %309 = vsyncpa [#allocation3], 1
    %s310 = scalar_lea.sflag [#allocation3], 1
    %311 = vsyncpa %s310, 1

</llo_original>
